<compile_context>
chip_gen: v7x
topology: tpu7x:2x2x1
jax: 0.10.0
libtpu: 0.0.40
codegen_flags: <defaults>
</compile_context>

<pallas_src>
import functools
import math

import jax
import jax.numpy as jnp
from jax import lax
from jax.experimental import pallas as pl
from jax.experimental.pallas import tpu as pltpu


def _sublane_multiple(dtype):
    # Native sublane packing: 8 rows (4-byte), 16 (2-byte), 32 (1-byte dtypes).
    return max(8, 32 // jnp.dtype(dtype).itemsize)


def _vmem_budgets():
    """Per-generation (x-tile byte budget, scoped vmem_limit_bytes)."""
    tile_budget, vmem_limit = 4 << 20, 32 << 20   # safe even on v5e (16 MiB scoped default)
    try:
        kind = jax.devices()[0].device_kind.lower()
        if "v7" in kind or "7x" in kind:
            # v7x: ~3.2 TB/s HBM -> bigger tiles to hide the ~0.35us per-step overhead.
            tile_budget, vmem_limit = 8 << 20, 48 << 20
    except Exception:
        pass
    return tile_budget, vmem_limit


# --------------------------------------------------------------------------------------
# Small-bag path: a whole bag fits in one tile -> block over batch, reduce fully in-step.
# --------------------------------------------------------------------------------------
def _mil_attention_batched_kernel(x_ref, w_ref, b_ref, o_ref):
    # x_ref: [TB, S, D] (native dtype), w_ref: [1, 1, D] f32, b_ref: [1, S, 1] f32
    # o_ref: [TB, 1, D]
    x = x_ref[...]
    # Score matvec on the VPU (lane reduce); N=1 would waste the MXU.
    scores = jnp.sum(x * w_ref[...], axis=-1, keepdims=True)        # [TB, S, 1] f32
    # tanh bounds scores -> exp in [1/e, e]; no max-subtraction needed.
    e = jnp.exp(jnp.tanh(scores + b_ref[...]))                      # [TB, S, 1] f32
    l = jnp.sum(e, axis=1, keepdims=True)                           # [TB, 1, 1]
    a = e / l + jnp.float32(1e-10)                                  # eps AFTER division
    o_ref[...] = jnp.sum(x * a, axis=1, keepdims=True).astype(o_ref.dtype)


# --------------------------------------------------------------------------------------
# Large-bag path: stream S tiles; one fused MXU contraction accumulates num and sum_s(x).
# --------------------------------------------------------------------------------------
def _mil_attention_tiled_kernel(x_ref, w_ref, b_ref, o_ref, acc_ref, l_ref,
                                *, seq_len, block_s, needs_mask):
    # x_ref: [TS, D] native, w_ref: [1, D] f32, b_ref: [TS, 1] f32, o_ref: [1, D]
    # acc_ref: [2, D] f32  (row 0: sum_s e_s*x_s ; row 1: sum_s x_s),  l_ref: [1, 1] f32
    k = pl.program_id(1)

    @pl.when(k == 0)
    def _init():
        acc_ref[...] = jnp.zeros_like(acc_ref)
        l_ref[...] = jnp.zeros_like(l_ref)

    x = x_ref[...]                                                   # native dtype
    scores = jnp.sum(x * w_ref[...], axis=-1, keepdims=True)        # [TS, 1] f32 (VPU+XLU)
    e = jnp.exp(jnp.tanh(scores + b_ref[...]))                      # [TS, 1] f32 (EUP)

    # Fused-contraction LHS: column 0 = e, column 1 = 1  ->  [e ; 1]^T @ x yields the
    # weighted numerator and sum_s(x) in a single MXU op (sum_s(x) is needed because the
    # module adds 1e-10 AFTER the division:  out = num/l + 1e-10 * sum_s(x)).
    lane = lax.broadcasted_iota(jnp.int32, (block_s, 2), 1)
    lhs = jnp.where(lane == 0, e, 1.0)                               # [TS, 2] f32

    def accumulate(e_v, lhs_v, x_v):
        acc_ref[...] += lax.dot_general(
            lhs_v.astype(x_v.dtype), x_v,
            dimension_numbers=(((0,), (0,)), ((), ())),
            preferred_element_type=jnp.float32,
            precision=lax.Precision.HIGHEST)                         # [2, D] f32
        l_ref[...] += jnp.sum(e_v, axis=0, keepdims=True)            # [1, 1] f32

    if needs_mask:
        # S is not a multiple of block_s: only the LAST tile contains invalid rows, so
        # the iota/compare/select masking only runs on that tile.
        is_tail = k == pl.num_programs(1) - 1

        @pl.when(k != pl.num_programs(1) - 1)
        def _full_tile():
            accumulate(e, lhs, x)

        @pl.when(is_tail)
        def _tail_tile():
            rows = lax.broadcasted_iota(jnp.int32, (block_s, 1), 0)
            valid = rows < (seq_len - k * block_s)
            # Zero the garbage rows of the partial block: e/lhs (feeding l, num, sx) and
            # x itself so NaN/Inf garbage cannot leak through 0*garbage in the dot.
            accumulate(jnp.where(valid, e, 0.0),
                       jnp.where(valid, lhs, 0.0),
                       jnp.where(valid, x, 0))
    else:
        accumulate(e, lhs, x)

    @pl.when(k == pl.num_programs(1) - 1)
    def _finalize():
        l = l_ref[...]
        inv_l = pl.reciprocal(l, approx=True)                        # EUP vrcp (free slot)
        inv_l = inv_l * (2.0 - l * inv_l)                            # Newton step -> ~f32
        acc = acc_ref[...]
        out = acc[0:1, :] * inv_l + jnp.float32(1e-10) * acc[1:2, :]
        o_ref[...] = out.astype(o_ref.dtype)


def attention_forward(x, weight, bias, *, block_s=None, batch_block=None):
    """x: [B, S, D], weight: [D, 1], bias: [S]  ->  [B, D]"""
    B, S, D = x.shape
    dtype = x.dtype
    itemsize = jnp.dtype(dtype).itemsize
    tile_budget, vmem_limit = _vmem_budgets()

    w_row = weight.astype(jnp.float32).reshape(1, D)
    bias_f32 = bias.astype(jnp.float32)

    bag_bytes = S * D * itemsize
    use_batched = (block_s is None) and (bag_bytes <= tile_budget)

    if use_batched:
        # Whole bag fits in one tile: block over the batch axis so each DMA stays MiB-scale
        # and the ~0.35us per-grid-step overhead is amortized over TB bags.
        tb = batch_block if batch_block is not None else max(1, tile_budget // max(bag_bytes, 1))
        tb = max(1, min(tb, B))
        out3 = pl.pallas_call(
            _mil_attention_batched_kernel,
            out_shape=jax.ShapeDtypeStruct((B, 1, D), dtype),
            grid=(pl.cdiv(B, tb),),
            in_specs=[
                pl.BlockSpec((tb, S, D), lambda i: (i, 0, 0)),      # TB bags per step
                pl.BlockSpec((1, 1, D), lambda i: (0, 0, 0)),       # weight
                pl.BlockSpec((1, S, 1), lambda i: (0, 0, 0)),       # bias
            ],
            out_specs=pl.BlockSpec((tb, 1, D), lambda i: (i, 0, 0)),
            compiler_params=pltpu.CompilerParams(
                dimension_semantics=("parallel",),
                vmem_limit_bytes=vmem_limit),
        )(x, w_row.reshape(1, 1, D), bias_f32.reshape(1, S, 1))
        return out3.reshape(B, D)

    # ---- S-tiled streaming path (large bags) ----
    sub = _sublane_multiple(dtype)
    if block_s is None:
        block_s = max(sub, tile_budget // max(D * itemsize, 1))
    block_s = min(block_s, S)
    if S >= sub:
        block_s = max(sub, (block_s // sub) * sub)   # dtype-native sublane multiple
    # else: tiny S -> single full-extent tile (block_s == S)
    n_k = pl.cdiv(S, block_s)
    needs_mask = (S % block_s) != 0                  # NO wrapper-side padding of x

    kernel = functools.partial(_mil_attention_tiled_kernel,
                               seq_len=S, block_s=block_s, needs_mask=needs_mask)

    # TODO(synk): for B == 1 on v7x, split the S reduction across the two TensorCores
    # (per-core partial num/sx/l + tiny combine) so both cores stream HBM.
    out3 = pl.pallas_call(
        kernel,
        out_shape=jax.ShapeDtypeStruct((B, 1, D), dtype),
        grid=(B, n_k),
        in_specs=[
            pl.BlockSpec((None, block_s, D), lambda b, k: (b, k, 0)),   # x tile, full D
            pl.BlockSpec((1, D), lambda b, k: (0, 0)),                  # weight row
            pl.BlockSpec((block_s, 1), lambda b, k: (k, 0)),            # bias slice
        ],
        out_specs=pl.BlockSpec((None, 1, D), lambda b, k: (b, 0, 0)),
        scratch_shapes=[
            pltpu.VMEM((2, D), jnp.float32),    # fused num / sum_s(x) accumulator
            pltpu.VMEM((1, 1), jnp.float32),    # l (sum of exp) accumulator
        ],
        compiler_params=pltpu.CompilerParams(
            # batch axis sharded across cores on multi-core parts; S axis is a reduction.
            dimension_semantics=("parallel", "arbitrary"),
            vmem_limit_bytes=vmem_limit),
    )(x, w_row, bias_f32.reshape(S, 1))
    return out3.reshape(B, D)


def attention_reference(x, weight, bias):
    B, S, D = x.shape
    eij = (x.reshape(-1, D) @ weight).reshape(B, S) + bias[None, :]
    eij = jnp.tanh(eij)
    a = jnp.exp(eij)
    a = a / jnp.sum(a, axis=1, keepdims=True) + 1e-10
    return jnp.sum(x * a[:, :, None], axis=1)


if __name__ == "__main__":
    key = jax.random.PRNGKey(0)
    kx1, kx2, kx3, kw, kb = jax.random.split(key, 5)

    def check(x, weight, bias, **kwargs):
        out = attention_forward(x, weight, bias, **kwargs)
        out = jax.block_until_ready(out)
        ref = attention_reference(x, weight, bias)
        assert out.shape == ref.shape
        err = jnp.max(jnp.abs(out - ref))
        assert jnp.allclose(out, ref, atol=3e-5, rtol=3e-5), (
            f"mismatch vs reference, max abs err {err}")

    D = 32
    # Deterministic parameter init mirroring the module: xavier_uniform_ on (D, 1).
    bound = math.sqrt(6.0 / (D + 1))
    weight = jax.random.uniform(kw, (D, 1), dtype=jnp.float32,
                                minval=-bound, maxval=bound)

    # Case 1: tiled path, multi-tile S accumulation, no tail mask (S % block_s == 0).
    B, S = 2, 16
    x1 = jax.random.normal(kx1, (B, S, D), dtype=jnp.float32)
    bias1 = 0.1 * jax.random.normal(kb, (S,), dtype=jnp.float32)
    check(x1, weight, bias1, block_s=8)

    # Case 2: tiled path with a partial tail tile (S=12, block_s=8) -> in-kernel mask,
    # no wrapper padding (zero bias, matching the module's init).
    S2 = 12
    x2 = jax.random.normal(kx2, (B, S2, D), dtype=jnp.float32)
    bias2 = jnp.zeros((S2,), dtype=jnp.float32)
    check(x2, weight, bias2, block_s=8)

    # Case 3: small-bag batched path (default tiling), all bags in one grid step.
    check(x1, weight, bias1)

    # Case 4: small-bag batched path with a partial batch tail block (B=3, TB=2).
    x3 = jax.random.normal(kx3, (3, S, D), dtype=jnp.float32)
    check(x3, weight, bias1, batch_block=2)

    print("KERNEL_OK")
</pallas_src>

<mosaic_0001>
module attributes {stable_mosaic.version = 11 : i64} {
  func.func @_mil_attention_tiled_kernel(%arg0: i32, %arg1: i32, %arg2: memref<1x8x32xf32, #tpu.memory_space<vmem>>, %arg3: memref<1x32xf32, #tpu.memory_space<vmem>>, %arg4: memref<8x1xf32, #tpu.memory_space<vmem>>, %arg5: memref<1x1x32xf32, #tpu.memory_space<vmem>>, %arg6: memref<2x32xf32, #tpu.memory_space<vmem>>, %arg7: memref<1x1xf32, #tpu.memory_space<vmem>>) attributes {dimension_semantics = [#tpu.dimension_semantics<parallel>, #tpu.dimension_semantics<arbitrary>], iteration_bounds = array<i64: 2, 2>, scalar_prefetch = 0 : i64, scratch_operands = 2 : i64, tpu.core_type = #tpu.core_type<tc>, window_params = [{transform_indices = @transform_0, window_bounds = array<i64: 1, 8, 32>}, {pipeline_mode = #tpu.pipeline_mode<synchronous>, transform_indices = @transform_1, window_bounds = array<i64: 1, 32>}, {transform_indices = @transform_2, window_bounds = array<i64: 8, 1>}, {transform_indices = @transform_3, window_bounds = array<i64: 1, 1, 32>}]} {
    %c0_i32 = arith.constant 0 : i32
    %0 = arith.cmpi eq, %arg1, %c0_i32 : i32
    %1 = arith.extui %0 : i1 to i32
    %c0_i32_0 = arith.constant 0 : i32
    %2 = arith.cmpi ne, %1, %c0_i32_0 : i32
    scf.if %2 {
      %cst_20 = arith.constant 0.000000e+00 : f32
      %33 = vector.broadcast %cst_20 : f32 to vector<2x32xf32>
      %c0_21 = arith.constant 0 : index
      %c0_22 = arith.constant 0 : index
      %34 = vector.load %arg6[%c0_21, %c0_22] : memref<2x32xf32, #tpu.memory_space<vmem>>, vector<2x32xf32>
      tpu.vector_store %arg6[%c0_21, %c0_22], %33 {strides = array<i32>} : memref<2x32xf32, #tpu.memory_space<vmem>>, vector<2x32xf32>,
      %cst_23 = arith.constant 0.000000e+00 : f32
      %35 = vector.broadcast %cst_23 : f32 to vector<1x1xf32>
      %c0_24 = arith.constant 0 : index
      %c0_25 = arith.constant 0 : index
      %36 = vector.load %arg7[%c0_24, %c0_25] : memref<1x1xf32, #tpu.memory_space<vmem>>, vector<1x1xf32>
      tpu.vector_store %arg7[%c0_24, %c0_25], %35 {strides = array<i32>} : memref<1x1xf32, #tpu.memory_space<vmem>>, vector<1x1xf32>,
    } else {
    }
    %c0 = arith.constant 0 : index
    %c0_1 = arith.constant 0 : index
    %c0_2 = arith.constant 0 : index
    %3 = vector.load %arg2[%c0, %c0_1, %c0_2] : memref<1x8x32xf32, #tpu.memory_space<vmem>>, vector<1x8x32xf32>
    %4 = vector.shape_cast %3 : vector<1x8x32xf32> to vector<8x32xf32>
    %c0_3 = arith.constant 0 : index
    %c0_4 = arith.constant 0 : index
    %5 = vector.load %arg3[%c0_3, %c0_4] : memref<1x32xf32, #tpu.memory_space<vmem>>, vector<1x32xf32>
    %6 = vector.broadcast %5 : vector<1x32xf32> to vector<8x32xf32>
    %7 = arith.mulf %4, %6 : vector<8x32xf32>
    %cst = arith.constant dense<0.000000e+00> : vector<8xf32>
    %8 = vector.multi_reduction <add>, %7, %cst [1] : vector<8x32xf32> to vector<8xf32>
    %9 = vector.shape_cast %8 : vector<8xf32> to vector<8x1xf32>
    %c0_5 = arith.constant 0 : index
    %c0_6 = arith.constant 0 : index
    %10 = vector.load %arg4[%c0_5, %c0_6] : memref<8x1xf32, #tpu.memory_space<vmem>>, vector<8x1xf32>
    %11 = arith.addf %9, %10 : vector<8x1xf32>
    %12 = math.tanh %11 : vector<8x1xf32>
    %13 = math.exp %12 : vector<8x1xf32>
    %14 = tpu.iota {dimensions = array<i32: 1>} : vector<8x2xi32>
    %c0_i32_7 = arith.constant 0 : i32
    %15 = vector.broadcast %c0_i32_7 : i32 to vector<8x2xi32>
    %16 = arith.cmpi eq, %14, %15 : vector<8x2xi32>
    %cst_8 = arith.constant 1.000000e+00 : f32
    %17 = vector.shape_cast %13 : vector<8x1xf32> to vector<8x1xf32>
    %18 = vector.broadcast %17 : vector<8x1xf32> to vector<8x2xf32>
    %19 = vector.broadcast %cst_8 : f32 to vector<8x2xf32>
    %20 = arith.select %16, %18, %19 : vector<8x2xi1>, vector<8x2xf32>
    %c0_9 = arith.constant 0 : index
    %c0_10 = arith.constant 0 : index
    %21 = vector.load %arg6[%c0_9, %c0_10] : memref<2x32xf32, #tpu.memory_space<vmem>>, vector<2x32xf32>
    %cst_11 = arith.constant dense<0.000000e+00> : vector<2x32xf32>
    %22 = tpu.matmul %20, %4, %cst_11 {dimension_numbers = #tpu.dot_dimension_numbers<[0], [0], [1], [1], [0, 1, 1, 1], [], []>, precision = #tpu.contract_precision<fp32>} : vector<8x2xf32>, vector<8x32xf32>, vector<2x32xf32> -> vector<2x32xf32>
    %23 = arith.addf %21, %22 : vector<2x32xf32>
    %c0_12 = arith.constant 0 : index
    %c0_13 = arith.constant 0 : index
    %24 = vector.load %arg6[%c0_12, %c0_13] : memref<2x32xf32, #tpu.memory_space<vmem>>, vector<2x32xf32>
    tpu.vector_store %arg6[%c0_12, %c0_13], %23 {strides = array<i32>} : memref<2x32xf32, #tpu.memory_space<vmem>>, vector<2x32xf32>,
    %c0_14 = arith.constant 0 : index
    %c0_15 = arith.constant 0 : index
    %25 = vector.load %arg7[%c0_14, %c0_15] : memref<1x1xf32, #tpu.memory_space<vmem>>, vector<1x1xf32>
    %cst_16 = arith.constant dense<0.000000e+00> : vector<1xf32>
    %26 = vector.multi_reduction <add>, %13, %cst_16 [0] : vector<8x1xf32> to vector<1xf32>
    %27 = vector.shape_cast %26 : vector<1xf32> to vector<1x1xf32>
    %28 = arith.addf %25, %27 : vector<1x1xf32>
    %c0_17 = arith.constant 0 : index
    %c0_18 = arith.constant 0 : index
    %29 = vector.load %arg7[%c0_17, %c0_18] : memref<1x1xf32, #tpu.memory_space<vmem>>, vector<1x1xf32>
    tpu.vector_store %arg7[%c0_17, %c0_18], %28 {strides = array<i32>} : memref<1x1xf32, #tpu.memory_space<vmem>>, vector<1x1xf32>,
    %c1_i32 = arith.constant 1 : i32
    %30 = arith.cmpi eq, %arg1, %c1_i32 : i32
    %31 = arith.extui %30 : i1 to i32
    %c0_i32_19 = arith.constant 0 : i32
    %32 = arith.cmpi ne, %31, %c0_i32_19 : i32
    scf.if %32 {
      %c0_20 = arith.constant 0 : index
      %c0_21 = arith.constant 0 : index
      %33 = vector.load %arg7[%c0_20, %c0_21] : memref<1x1xf32, #tpu.memory_space<vmem>>, vector<1x1xf32>
      %34 = tpu.reciprocal %33 {approx = true} : vector<1x1xf32> -> vector<1x1xf32>
      %35 = arith.mulf %33, %34 : vector<1x1xf32>
      %cst_22 = arith.constant 2.000000e+00 : f32
      %36 = vector.broadcast %cst_22 : f32 to vector<1x1xf32>
      %37 = arith.subf %36, %35 : vector<1x1xf32>
      %38 = arith.mulf %34, %37 : vector<1x1xf32>
      %c0_23 = arith.constant 0 : index
      %c0_24 = arith.constant 0 : index
      %39 = vector.load %arg6[%c0_23, %c0_24] : memref<2x32xf32, #tpu.memory_space<vmem>>, vector<2x32xf32>
      %40 = vector.extract_strided_slice %39 {offsets = [0, 0], sizes = [1, 32], strides = [1, 1]} : vector<2x32xf32> to vector<1x32xf32>
      %41 = vector.broadcast %38 : vector<1x1xf32> to vector<1x32xf32>
      %42 = arith.mulf %40, %41 : vector<1x32xf32>
      %43 = vector.extract_strided_slice %39 {offsets = [1, 0], sizes = [1, 32], strides = [1, 1]} : vector<2x32xf32> to vector<1x32xf32>
      %cst_25 = arith.constant 1.000000e-10 : f32
      %44 = vector.broadcast %cst_25 : f32 to vector<1x32xf32>
      %45 = arith.mulf %44, %43 : vector<1x32xf32>
      %46 = arith.addf %42, %45 : vector<1x32xf32>
      %c0_26 = arith.constant 0 : index
      %c0_27 = arith.constant 0 : index
      %c0_28 = arith.constant 0 : index
      %47 = vector.load %arg5[%c0_26, %c0_27, %c0_28] : memref<1x1x32xf32, #tpu.memory_space<vmem>>, vector<1x1x32xf32>
      %48 = vector.shape_cast %47 : vector<1x1x32xf32> to vector<1x32xf32>
      %49 = vector.shape_cast %46 : vector<1x32xf32> to vector<1x1x32xf32>
      tpu.vector_store %arg5[%c0_26, %c0_27, %c0_28], %49 {strides = array<i32>} : memref<1x1x32xf32, #tpu.memory_space<vmem>>, vector<1x1x32xf32>,
    } else {
    }
    return
  }
  func.func @transform_0(%arg0: i32, %arg1: i32) -> (i32, i32, i32) {
    %c0_i32 = arith.constant 0 : i32
    %c0_i32_0 = arith.constant 0 : i32
    return %arg0, %arg1, %c0_i32 : i32, i32, i32
  }
  func.func @transform_1(%arg0: i32, %arg1: i32) -> (i32, i32) {
    %c0_i32 = arith.constant 0 : i32
    %c0_i32_0 = arith.constant 0 : i32
    %c0_i32_1 = arith.constant 0 : i32
    return %c0_i32, %c0_i32_0 : i32, i32
  }
  func.func @transform_2(%arg0: i32, %arg1: i32) -> (i32, i32) {
    %c0_i32 = arith.constant 0 : i32
    %c0_i32_0 = arith.constant 0 : i32
    return %arg1, %c0_i32 : i32, i32
  }
  func.func @transform_3(%arg0: i32, %arg1: i32) -> (i32, i32, i32) {
    %c0_i32 = arith.constant 0 : i32
    %c0_i32_0 = arith.constant 0 : i32
    %c0_i32_1 = arith.constant 0 : i32
    return %arg0, %c0_i32, %c0_i32_0 : i32, i32, i32
  }
}

</mosaic_0001>

<llo_original>
// kernel: tpu_custom_call.1
$region0: #{tpu_custom_call.1}
  #allocation0 [shape = 'u32[]', space=smem, size = 0x4, offset = 0x4, fixed_abs, tag = 'smem constant byte address 0x4 - core index']
  #allocation1 [shape = 'u32[144,128]{1,0:T(1,128)}', space=vmem, size = 0x12000, scoped, tag = 'internal scratch']
  #allocation2 [shape = 'f32[2,32]{1,0:T(2,128)}', space=vmem, size = 0x400, scoped, tag = 'scratch operand']
  #allocation3 [shape = 'f32[1,1]{1,0:T(1,128)}', space=vmem, size = 0x200, scoped, tag = 'scratch operand']
  %s0 = inlined_call_operand.hbm [shape: f32[2,16,32], index: 0, kind: input, shape index: {}]
  %s1 = inlined_call_operand.vmem [shape: f32[1,32], index: 1, kind: input, shape index: {}]
  %s2 = inlined_call_operand.vmem [shape: f32[16,1], index: 2, kind: input, shape index: {}]
  %s3 = inlined_call_operand.hbm [shape: f32[2,1,32], index: 3, kind: output, shape index: {}]
  %s4 = sld [smem:[#allocation0]]
  $region57: #{tpu_custom_call.1} parent=0
    _
  %s6 = ssub.s32 1, %s4
  %s7 = scalar_select 0, %s6, %s4
  $region1: #{tpu_custom_call.1} parent=0
    #allocation4 [shape = 'u8[8192]{0}', space=vmem, size = 0x2000, scoped, tag = 'input window, operand 0']
    #allocation5 [shape = 's32[2]{0}', space=sflag, size = 0x8, scoped, tag = 'scoped memory for tpu_custom_call.1']
    #allocation6 [shape = 's32[2]{0}', space=sflag, size = 0x8, scoped, tag = 'scoped memory for tpu_custom_call.1']
    #allocation7 [shape = 'u8[1024]{0}', space=vmem, size = 0x400, scoped, tag = 'output window, operand 0']
    %8 = vsyncpa [#allocation5], 0
    %s9 = scalar_lea.sflag [#allocation5], 1
    %10 = vsyncpa %s9, 0
    %11 = vsyncpa [#allocation6], 0
    %s12 = scalar_lea.sflag [#allocation6], 1
    %13 = vsyncpa %s12, 0
    loop: start=0, step=1, limit=6
    $region2: #{tpu_custom_call.1} parent=1 // loop_pre_header
      _
    $region3: #{tpu_custom_call.1} parent=1 // loop_header
      %s15 = sphi 0, %s19
      %p16 = scmp.ge.s32.totalorder %s15, 6
      %s22 = sphi 0, %s34
      %s23 = sphi 0, %s30
      %s24 = sphi 0, %s22
      %s25 = sphi 0, %s23
      %s26 = sphi 0, %s24
      %s27 = sphi 0, %s25
      %s39 = sphi 0, %s41
      %s42 = sphi 0, %s39
      %s43 = sphi 0, %s42
      %s59 = sphi 0, %s43
      %s63 = sphi 0, %s63
      %s65 = sphi 0, %s63
      %s66 = sphi 0, %s65
      %s80 = sphi 0, %s66
      %s86 = sphi 0, %s88
      %s89 = sphi 0, %s86
      %s90 = sphi 0, %s89
      %s106 = sphi 0, %s90
      %s112 = sphi 0, %s114
      %s115 = sphi 0, %s112
      %s116 = sphi 0, %s115
      %s132 = sphi 0, %s116
    $region4: #{tpu_custom_call.1} parent=1 // loop_header_branch
      %18 = sbr.rel (%p16) target = $region8
    $region5: #{tpu_custom_call.1} parent=1 // loop_body
      %s20 = ssub.s32 %s15, 1
      %s21 = ssub.s32 %s15, 2
      %s28 = sadd.s32 1, %s23
      %p29 = scmp.ge.s32.totalorder %s28, 2
      %s30 = scalar_select %p29, 0, %s28
      %s31 = sadd.s32 1, %s22
      %s32 = scalar_select %p29, %s31, %s22
      %p33 = scmp.ge.s32.totalorder %s32, 2
      %s34 = scalar_select %p33, 0, %s32
      %s35 = ssub.s32 %s22, %s34
      %s36 = ssub.s32 %s23, %s30
      %s37 = sor.u32 %s35, %s36
      %p38 = scmp.eq.s32.totalorder %s37, 0
      %s40 = sadd.s32 %s39, 1
      %s41 = scalar_select %p38, %s39, %s40
      %p44 = pneg %p38
      %p45 = scmp.eq.s32.totalorder %s15, 3
      %p46 = por %p44, %p45
      %p47 = scmp.ne.s32.totalorder %s39, %s42
      %p48 = scmp.eq.s32.totalorder %s15, 0
      %p49 = por %p47, %p48
      %p50 = scmp.ne.s32.totalorder %s39, %s42
      %p51 = scmp.eq.s32.totalorder %s20, 3
      %p52 = por %p50, %p51
      %p53 = scmp.ne.s32.totalorder %s42, %s43
      %p54 = scmp.eq.s32.totalorder %s20, 0
      %p55 = por %p53, %p54
      %p56 = scmp.ne.s32.totalorder %s42, %s43
      %p57 = scmp.eq.s32.totalorder %s21, 3
      %p58 = por %p56, %p57
      %p60 = scmp.ne.s32.totalorder %s43, %s59
      %p61 = scmp.eq.s32.totalorder %s21, 0
      %p62 = por %p60, %p61
      %s64 = sadd.s32 %s63, 1
      %p67 = scmp.eq.s32.totalorder %s15, 3
      %p68 = scmp.ne.s32.totalorder %s63, %s65
      %p69 = scmp.eq.s32.totalorder %s15, 0
      %p70 = por %p68, %p69
      %p71 = scmp.ne.s32.totalorder %s63, %s65
      %p72 = scmp.eq.s32.totalorder %s20, 3
      %p73 = por %p71, %p72
      %p74 = scmp.ne.s32.totalorder %s65, %s66
      %p75 = scmp.eq.s32.totalorder %s20, 0
      %p76 = por %p74, %p75
      %p77 = scmp.ne.s32.totalorder %s65, %s66
      %p78 = scmp.eq.s32.totalorder %s21, 3
      %p79 = por %p77, %p78
      %p81 = scmp.ne.s32.totalorder %s66, %s80
      %p82 = scmp.eq.s32.totalorder %s21, 0
      %p83 = por %p81, %p82
      %s84 = ssub.s32 %s23, %s30
      %p85 = scmp.eq.s32.totalorder %s84, 0
      %s87 = sadd.s32 %s86, 1
      %s88 = scalar_select %p85, %s86, %s87
      %p91 = pneg %p85
      %p92 = scmp.eq.s32.totalorder %s15, 3
      %p93 = por %p91, %p92
      %p94 = scmp.ne.s32.totalorder %s86, %s89
      %p95 = scmp.eq.s32.totalorder %s15, 0
      %p96 = por %p94, %p95
      %p97 = scmp.ne.s32.totalorder %s86, %s89
      %p98 = scmp.eq.s32.totalorder %s20, 3
      %p99 = por %p97, %p98
      %p100 = scmp.ne.s32.totalorder %s89, %s90
      %p101 = scmp.eq.s32.totalorder %s20, 0
      %p102 = por %p100, %p101
      %p103 = scmp.ne.s32.totalorder %s89, %s90
      %p104 = scmp.eq.s32.totalorder %s21, 3
      %p105 = por %p103, %p104
      %p107 = scmp.ne.s32.totalorder %s90, %s106
      %p108 = scmp.eq.s32.totalorder %s21, 0
      %p109 = por %p107, %p108
      %s110 = ssub.s32 %s22, %s34
      %p111 = scmp.eq.s32.totalorder %s110, 0
      %s113 = sadd.s32 %s112, 1
      %s114 = scalar_select %p111, %s112, %s113
      %p117 = pneg %p111
      %p118 = scmp.eq.s32.totalorder %s15, 3
      %p119 = por %p117, %p118
      %p120 = scmp.ne.s32.totalorder %s112, %s115
      %p121 = scmp.eq.s32.totalorder %s15, 0
      %p122 = por %p120, %p121
      %p123 = scmp.ne.s32.totalorder %s112, %s115
      %p124 = scmp.eq.s32.totalorder %s20, 3
      %p125 = por %p123, %p124
      %p126 = scmp.ne.s32.totalorder %s115, %s116
      %p127 = scmp.eq.s32.totalorder %s20, 0
      %p128 = por %p126, %p127
      %p129 = scmp.ne.s32.totalorder %s115, %s116
      %p130 = scmp.eq.s32.totalorder %s21, 3
      %p131 = por %p129, %p130
      %p133 = scmp.ne.s32.totalorder %s116, %s132
      %p134 = scmp.eq.s32.totalorder %s21, 0
      %p135 = por %p133, %p134
      %p136 = scmp.le.s32.totalorder 1, %s15
      %p137 = scmp.lt.s32.totalorder %s15, 5
      %p138 = pnand %p136, %p137
      %p139 = pneg %p138
      // Predicated region
      $region9: #{tpu_custom_call.1} parent=5 // pred_check
        _
      $region10: #{tpu_custom_call.1} parent=5 // pred_check_branch
        %141 = sbr.rel (%p138) target = $region12
      $region11: #{tpu_custom_call.1} parent=5 // pred_region
        %s142 = ssub.s32 %s15, 1
        // Predicated region
        $region13: #{tpu_custom_call.1} parent=11 // pred_check
          %p143 = pneg %p76
        $region14: #{tpu_custom_call.1} parent=11 // pred_check_branch
          %145 = sbr.rel (%p143) target = $region16
        $region15: #{tpu_custom_call.1} parent=11 // pred_region
          _
        $region16: #{tpu_custom_call.1} parent=11 // pred_fallthru
          _
      $region12: #{tpu_custom_call.1} parent=5 // pred_fallthru
        _
      %p146 = scmp.lt.s32.totalorder %s15, 4
      // Predicated region
      $region17: #{tpu_custom_call.1} parent=5 // pred_check
        %p147 = pneg %p146
      $region18: #{tpu_custom_call.1} parent=5 // pred_check_branch
        %149 = sbr.rel (%p147) target = $region20
      $region19: #{tpu_custom_call.1} parent=5 // pred_region
        // Predicated region
        $region21: #{tpu_custom_call.1} parent=19 // pred_check
          %p150 = pneg %p49
        $region22: #{tpu_custom_call.1} parent=19 // pred_check_branch
          %152 = sbr.rel (%p150) target = $region24
        $region23: #{tpu_custom_call.1} parent=19 // pred_region
          %s153 = sand.u32 %s39, 1
          %s154 = scalar_lea.sflag [#allocation5], %s153
          %s155 = sand.u32 %s39, 1
          %s156 = smul.addr %s155, 8
          %s157 = scalar_lea.vmem [#allocation4], %s156
          %s159 = ssub.s32 128, 128
          %160 = vsyncadd %s154, %s159
          %s161 = smul.addr %s22, 2
          %s162 = sadd.s32 %s23, %s161
          %s163 = smul.addr %s162, 128
          %s164 = scalar_lea.hbm %s0, %s163
          %s166 = sshll.u32 %s157, 4
          %s167 = int_to_ptr.vmem [resolvable:$true] %s166
          %169 = dma.hbm_to_vmem [thread:$0]  %s164, 128, %s167, %s154
        $region24: #{tpu_custom_call.1} parent=19 // pred_fallthru
          _
        // Predicated region
        $region25: #{tpu_custom_call.1} parent=19 // pred_check
          %p170 = pneg %p96
        $region26: #{tpu_custom_call.1} parent=19 // pred_check_branch
          %172 = sbr.rel (%p170) target = $region28
        $region27: #{tpu_custom_call.1} parent=19 // pred_region
          %p173 = scmp.lt.s32.totalorder %s23, 1
          %s174 = scalar_select %p173, %s23, 1
          %s175 = smul.addr %s174, 8
          %s176 = scalar_lea.vmem %s2, %s175
        $region28: #{tpu_custom_call.1} parent=19 // pred_fallthru
          _
      $region20: #{tpu_custom_call.1} parent=5 // pred_fallthru
        _
      %p177 = scmp.le.s32.totalorder 1, %s15
      %p178 = scmp.lt.s32.totalorder %s15, 5
      %p179 = pnand %p177, %p178
      %p180 = pneg %p179
      // Predicated region
      $region29: #{tpu_custom_call.1} parent=5 // pred_check
        _
      $region30: #{tpu_custom_call.1} parent=5 // pred_check_branch
        %182 = sbr.rel (%p179) target = $region32
      $region31: #{tpu_custom_call.1} parent=5 // pred_region
        %s183 = ssub.s32 %s15, 1
        %s184 = sand.u32 %s42, 1
        %s185 = scalar_lea.sflag [#allocation5], %s184
        %s186 = sand.u32 %s42, 1
        %s187 = smul.addr %s186, 8
        %s188 = scalar_lea.vmem [#allocation4], %s187
        // Predicated region
        $region33: #{tpu_custom_call.1} parent=31 // pred_check
          %p189 = pneg %p55
        $region34: #{tpu_custom_call.1} parent=31 // pred_check_branch
          %191 = sbr.rel (%p189) target = $region36
        $region35: #{tpu_custom_call.1} parent=31 // pred_region
          %192 = dma.done %s185, 128
        $region36: #{tpu_custom_call.1} parent=31 // pred_fallthru
          _
        %s193 = sand.u32 %s42, 1
        %s194 = scalar_lea.sflag [#allocation5], %s193
        %s195 = sand.u32 %s42, 1
        %s196 = smul.addr %s195, 8
        %s197 = scalar_lea.vmem [#allocation4], %s196
        %p198 = pneg %p55
        %p199 = pneg %p52
        %p200 = pneg %p76
        %p201 = pneg %p73
        %p202 = scmp.lt.s32.totalorder %s25, 1
        %s203 = scalar_select %p202, %s25, 1
        %s204 = smul.addr %s203, 8
        %s205 = scalar_lea.vmem %s2, %s204
        %p206 = pneg %p102
        %p207 = pneg %p99
        %p208 = pneg %p128
        %p209 = pneg %p125
        %s210 = sand.u32 %s115, 1
        %s211 = scalar_lea.sflag [#allocation6], %s210
        %s212 = sand.u32 %s115, 1
        %s213 = scalar_lea.vmem [#allocation7], %s212
        %p214 = scmp.lt.s32.totalorder %s25, 1
        %s215 = scalar_select %p214, %s25, 1
        %s216 = smul.addr %s215, 8
        %s217 = scalar_lea.vmem %s2, %s216
        %p218 = scmp.eq.s32.totalorder %s25, 0
        // Predicated region
        $region37: #{tpu_custom_call.1} parent=31 // pred_check
          %p219 = pneg %p218
        $region38: #{tpu_custom_call.1} parent=31 // pred_check_branch
          %221 = sbr.rel (%p219) target = $region40
        $region39: #{tpu_custom_call.1} parent=31 // pred_region
          %vm222 = vcmask 254976
          %223 = vst.msk [vmem:[#allocation2] sm:$0x3] %vm222, 0.0
          %vm224 = vcmask 0
          %225 = vst.msk [vmem:[#allocation3] sm:$0x1] %vm224, 0.0
        $region40: #{tpu_custom_call.1} parent=31 // pred_fallthru
          _
        %v226 = vld [vmem:[%s188] sm:$0xff]
        %v227 = vld [vmem:[%s1] sm:$0x1]
        %v229 = vlaneseq
        %v230 = vshrl.u32 %v229, 7
        %v231 = vsub.s32 0, %v230
        %v232 = vrot.slane %v227, %v231
        %v234 = vmul.f32 %v226, %v232
        %vm235 = vcmask 261120
        %v236 = vsel %vm235, %v234, 0.0
        %237 = vadd.xlane.f32.xlu0 %v236
        %v238 = vpop.xlane.xlu0 %237
        %v239 = vld [vmem:[%s217] sm:$0xff]
        %v240 = vadd.f32 %v238, %v239
        %v241 = vtanh.pop %v240
        %v242 = vmul.f32 %v241, 1.442695
        %v243 = vpow.pop %v242
        %v244 = vlaneseq
        %v245 = vand.u32 %v244, 127
        %vm246 = vcmp.eq.s32.totalorder %v245, 0
        %248 = vset.pattern.permute.xlu0 0
        %249 = vperm.xlu0 %248, %v243
        %v250 = vpop.permute.xlu0 %249
        %v252 = vsel %vm246, %v250, 1.0
        %v253 = vld [vmem:[#allocation2] sm:$0x3]
        %254 = vxpose.xlu0.b32.start [1/16] %v252, 128
        %255 = vxpose.xlu0.b32.cont [2/16] 0.0, 128
        %256 = vxpose.xlu0.b32.cont [3/16] 0.0, 128
        %257 = vxpose.xlu0.b32.cont [4/16] 0.0, 128
        %258 = vxpose.xlu0.b32.cont [5/16] 0.0, 128
        %259 = vxpose.xlu0.b32.cont [6/16] 0.0, 128
        %260 = vxpose.xlu0.b32.cont [7/16] 0.0, 128
        %261 = vxpose.xlu0.b32.cont [8/16] 0.0, 128
        %262 = vxpose.xlu0.b32.cont [9/16] 0.0, 128
        %263 = vxpose.xlu0.b32.cont [10/16] 0.0, 128
        %264 = vxpose.xlu0.b32.cont [11/16] 0.0, 128
        %265 = vxpose.xlu0.b32.cont [12/16] 0.0, 128
        %266 = vxpose.xlu0.b32.cont [13/16] 0.0, 128
        %267 = vxpose.xlu0.b32.cont [14/16] 0.0, 128
        %268 = vxpose.xlu0.b32.cont [15/16] 0.0, 128
        %269 = vxpose.xlu0.b32.end [16/16] 0.0, 128
        %v270 = vpop.trf.xlu0
        %v271 = vpop.trf.xlu0
        %v272 = vpop.trf.xlu0
        %v273 = vpop.trf.xlu0
        %v274 = vpop.trf.xlu0
        %v275 = vpop.trf.xlu0
        %v276 = vpop.trf.xlu0
        %v277 = vpop.trf.xlu0
        %v278 = vpop.trf.xlu0
        %v279 = vpop.trf.xlu0
        %v280 = vpop.trf.xlu0
        %v281 = vpop.trf.xlu0
        %v282 = vpop.trf.xlu0
        %v283 = vpop.trf.xlu0
        %v284 = vpop.trf.xlu0
        %v285 = vpop.trf.xlu0
        %vm286 = vcmask 64512
        %v288 = vsel %vm286, %v270, 0
        %290 = vmatprep.subr.mxu0 0.0
        %v291 = vand.u32 %v226, 4294901760
        %292 = vmatpush1.msra.mxu0 %v291
        %293 = vmatprep.subr.mxu0 0.0
        %294 = vmatpush1.msra.mxu0 0.0
        %295 = vmatprep.subr.mxu0 0.0
        %296 = vmatpush1.msra.mxu0 0.0
        %297 = vmatprep.subr.mxu0 0.0
        %298 = vmatpush1.msra.mxu0 0.0
        %299 = vmatprep.subr.mxu0 0.0
        %300 = vmatpush1.msra.mxu0 0.0
        %301 = vmatprep.subr.mxu0 0.0
        %302 = vmatpush1.msra.mxu0 0.0
        %303 = vmatprep.subr.mxu0 0.0
        %304 = vmatpush1.msra.mxu0 0.0
        %305 = vmatprep.subr.mxu0 0.0
        %306 = vmatpush1.msra.mxu0 0.0
        %307 = vmatprep.subr.mxu0 0.0
        %308 = vmatpush1.msra.mxu0 0.0
        %309 = vmatprep.subr.mxu0 0.0
        %310 = vmatpush1.msra.mxu0 0.0
        %311 = vmatprep.subr.mxu0 0.0
        %312 = vmatpush1.msra.mxu0 0.0
        %313 = vmatprep.subr.mxu0 0.0
        %314 = vmatpush1.msra.mxu0 0.0
        %315 = vmatprep.subr.mxu0 0.0
        %316 = vmatpush1.msra.mxu0 0.0
        %317 = vmatprep.subr.mxu0 0.0
        %318 = vmatpush1.msra.mxu0 0.0
        %319 = vmatprep.subr.mxu0 0.0
        %320 = vmatpush1.msra.mxu0 0.0
        %321 = vmatprep.subr.mxu0 0.0
        %322 = vmatpush1.msra.mxu0 0.0
        %323 = vmatprep.subr.mxu0 0.0
        %324 = vmatpush1.msra.mxu0 0.0
        %325 = vmatprep.subr.mxu0 0.0
        %326 = vmatpush1.msra.mxu0 0.0
        %327 = vmatprep.subr.mxu0 0.0
        %328 = vmatpush1.msra.mxu0 0.0
        %329 = vmatprep.subr.mxu0 0.0
        %330 = vmatpush1.msra.mxu0 0.0
        %331 = vmatprep.subr.mxu0 0.0
        %332 = vmatpush1.msra.mxu0 0.0
        %333 = vmatprep.subr.mxu0 0.0
        %334 = vmatpush1.msra.mxu0 0.0
        %335 = vmatprep.subr.mxu0 0.0
        %336 = vmatpush1.msra.mxu0 0.0
        %337 = vmatprep.subr.mxu0 0.0
        %338 = vmatpush1.msra.mxu0 0.0
        %339 = vmatprep.subr.mxu0 0.0
        %340 = vmatpush1.msra.mxu0 0.0
        %341 = vmatprep.subr.mxu0 0.0
        %342 = vmatpush1.msra.mxu0 0.0
        %343 = vmatprep.subr.mxu0 0.0
        %344 = vmatpush1.msra.mxu0 0.0
        %345 = vmatprep.subr.mxu0 0.0
        %346 = vmatpush1.msra.mxu0 0.0
        %347 = vmatprep.subr.mxu0 0.0
        %348 = vmatpush1.msra.mxu0 0.0
        %349 = vmatprep.subr.mxu0 0.0
        %350 = vmatpush1.msra.mxu0 0.0
        %351 = vmatprep.subr.mxu0 0.0
        %352 = vmatpush1.msra.mxu0 0.0
        %353 = vmatprep.subr.mxu0 0.0
        %354 = vmatpush1.msra.mxu0 0.0
        %355 = vmatprep.mubr.f32.mxu0 0.0
        %v356 = vand.u32 %v288, 4294901760
        %v357 = vsub.f32 %v288, %v356
        %v358 = vand.u32 %v357, 4294901760
        %v359 = vsub.f32 %v357, %v358
        %v360 = vand.u32 %v359, 4294901760
        %361 = vmatmul.mubr.f32.gmra.mrb[0].mxu0 %v360
        %v362 = vpop.f32.mrb[0].mxu0
        %v363 = vadd.f32 0.0, %v362
        %v364 = vpop.f32.mrb[0].mxu0
        %365 = vdwg.mxu0
        %366 = vmatprep.subr.mxu0 0.0
        %v367 = vand.u32 %v226, 4294901760
        %v368 = vsub.f32 %v226, %v367
        %v369 = vand.u32 %v368, 4294901760
        %v370 = vsub.f32 %v368, %v369
        %v371 = vand.u32 %v370, 4294901760
        %372 = vmatpush1.msra.mxu0 %v371
        %373 = vmatprep.subr.mxu0 0.0
        %374 = vmatpush1.msra.mxu0 0.0
        %375 = vmatprep.subr.mxu0 0.0
        %376 = vmatpush1.msra.mxu0 0.0
        %377 = vmatprep.subr.mxu0 0.0
        %378 = vmatpush1.msra.mxu0 0.0
        %379 = vmatprep.subr.mxu0 0.0
        %380 = vmatpush1.msra.mxu0 0.0
        %381 = vmatprep.subr.mxu0 0.0
        %382 = vmatpush1.msra.mxu0 0.0
        %383 = vmatprep.subr.mxu0 0.0
        %384 = vmatpush1.msra.mxu0 0.0
        %385 = vmatprep.subr.mxu0 0.0
        %386 = vmatpush1.msra.mxu0 0.0
        %387 = vmatprep.subr.mxu0 0.0
        %388 = vmatpush1.msra.mxu0 0.0
        %389 = vmatprep.subr.mxu0 0.0
        %390 = vmatpush1.msra.mxu0 0.0
        %391 = vmatprep.subr.mxu0 0.0
        %392 = vmatpush1.msra.mxu0 0.0
        %393 = vmatprep.subr.mxu0 0.0
        %394 = vmatpush1.msra.mxu0 0.0
        %395 = vmatprep.subr.mxu0 0.0
        %396 = vmatpush1.msra.mxu0 0.0
        %397 = vmatprep.subr.mxu0 0.0
        %398 = vmatpush1.msra.mxu0 0.0
        %399 = vmatprep.subr.mxu0 0.0
        %400 = vmatpush1.msra.mxu0 0.0
        %401 = vmatprep.subr.mxu0 0.0
        %402 = vmatpush1.msra.mxu0 0.0
        %403 = vmatprep.subr.mxu0 0.0
        %404 = vmatpush1.msra.mxu0 0.0
        %405 = vmatprep.subr.mxu0 0.0
        %406 = vmatpush1.msra.mxu0 0.0
        %407 = vmatprep.subr.mxu0 0.0
        %408 = vmatpush1.msra.mxu0 0.0
        %409 = vmatprep.subr.mxu0 0.0
        %410 = vmatpush1.msra.mxu0 0.0
        %411 = vmatprep.subr.mxu0 0.0
        %412 = vmatpush1.msra.mxu0 0.0
        %413 = vmatprep.subr.mxu0 0.0
        %414 = vmatpush1.msra.mxu0 0.0
        %415 = vmatprep.subr.mxu0 0.0
        %416 = vmatpush1.msra.mxu0 0.0
        %417 = vmatprep.subr.mxu0 0.0
        %418 = vmatpush1.msra.mxu0 0.0
        %419 = vmatprep.subr.mxu0 0.0
        %420 = vmatpush1.msra.mxu0 0.0
        %421 = vmatprep.subr.mxu0 0.0
        %422 = vmatpush1.msra.mxu0 0.0
        %423 = vmatprep.subr.mxu0 0.0
        %424 = vmatpush1.msra.mxu0 0.0
        %425 = vmatprep.subr.mxu0 0.0
        %426 = vmatpush1.msra.mxu0 0.0
        %427 = vmatprep.subr.mxu0 0.0
        %428 = vmatpush1.msra.mxu0 0.0
        %429 = vmatprep.subr.mxu0 0.0
        %430 = vmatpush1.msra.mxu0 0.0
        %431 = vmatprep.subr.mxu0 0.0
        %432 = vmatpush1.msra.mxu0 0.0
        %433 = vmatprep.subr.mxu0 0.0
        %434 = vmatpush1.msra.mxu0 0.0
        %435 = vmatprep.mubr.f32.mxu0 0.0
        %v436 = vand.u32 %v288, 4294901760
        %437 = vmatmul.mubr.f32.gmra.mrb[0].mxu0 %v436
        %v438 = vpop.f32.mrb[0].mxu0
        %v439 = vadd.f32 %v363, %v438
        %v440 = vpop.f32.mrb[0].mxu0
        %441 = vdwg.mxu0
        %442 = vmatprep.subr.mxu0 0.0
        %v443 = vand.u32 %v226, 4294901760
        %v444 = vsub.f32 %v226, %v443
        %445 = vmatpush1.msra.mxu0 %v444
        %446 = vmatprep.subr.mxu0 0.0
        %447 = vmatpush1.msra.mxu0 0.0
        %448 = vmatprep.subr.mxu0 0.0
        %449 = vmatpush1.msra.mxu0 0.0
        %450 = vmatprep.subr.mxu0 0.0
        %451 = vmatpush1.msra.mxu0 0.0
        %452 = vmatprep.subr.mxu0 0.0
        %453 = vmatpush1.msra.mxu0 0.0
        %454 = vmatprep.subr.mxu0 0.0
        %455 = vmatpush1.msra.mxu0 0.0
        %456 = vmatprep.subr.mxu0 0.0
        %457 = vmatpush1.msra.mxu0 0.0
        %458 = vmatprep.subr.mxu0 0.0
        %459 = vmatpush1.msra.mxu0 0.0
        %460 = vmatprep.subr.mxu0 0.0
        %461 = vmatpush1.msra.mxu0 0.0
        %462 = vmatprep.subr.mxu0 0.0
        %463 = vmatpush1.msra.mxu0 0.0
        %464 = vmatprep.subr.mxu0 0.0
        %465 = vmatpush1.msra.mxu0 0.0
        %466 = vmatprep.subr.mxu0 0.0
        %467 = vmatpush1.msra.mxu0 0.0
        %468 = vmatprep.subr.mxu0 0.0
        %469 = vmatpush1.msra.mxu0 0.0
        %470 = vmatprep.subr.mxu0 0.0
        %471 = vmatpush1.msra.mxu0 0.0
        %472 = vmatprep.subr.mxu0 0.0
        %473 = vmatpush1.msra.mxu0 0.0
        %474 = vmatprep.subr.mxu0 0.0
        %475 = vmatpush1.msra.mxu0 0.0
        %476 = vmatprep.subr.mxu0 0.0
        %477 = vmatpush1.msra.mxu0 0.0
        %478 = vmatprep.subr.mxu0 0.0
        %479 = vmatpush1.msra.mxu0 0.0
        %480 = vmatprep.subr.mxu0 0.0
        %481 = vmatpush1.msra.mxu0 0.0
        %482 = vmatprep.subr.mxu0 0.0
        %483 = vmatpush1.msra.mxu0 0.0
        %484 = vmatprep.subr.mxu0 0.0
        %485 = vmatpush1.msra.mxu0 0.0
        %486 = vmatprep.subr.mxu0 0.0
        %487 = vmatpush1.msra.mxu0 0.0
        %488 = vmatprep.subr.mxu0 0.0
        %489 = vmatpush1.msra.mxu0 0.0
        %490 = vmatprep.subr.mxu0 0.0
        %491 = vmatpush1.msra.mxu0 0.0
        %492 = vmatprep.subr.mxu0 0.0
        %493 = vmatpush1.msra.mxu0 0.0
        %494 = vmatprep.subr.mxu0 0.0
        %495 = vmatpush1.msra.mxu0 0.0
        %496 = vmatprep.subr.mxu0 0.0
        %497 = vmatpush1.msra.mxu0 0.0
        %498 = vmatprep.subr.mxu0 0.0
        %499 = vmatpush1.msra.mxu0 0.0
        %500 = vmatprep.subr.mxu0 0.0
        %501 = vmatpush1.msra.mxu0 0.0
        %502 = vmatprep.subr.mxu0 0.0
        %503 = vmatpush1.msra.mxu0 0.0
        %504 = vmatprep.subr.mxu0 0.0
        %505 = vmatpush1.msra.mxu0 0.0
        %506 = vmatprep.subr.mxu0 0.0
        %507 = vmatpush1.msra.mxu0 0.0
        %508 = vmatprep.mubr.f32.mxu0 0.0
        %v509 = vand.u32 %v288, 4294901760
        %v510 = vsub.f32 %v288, %v509
        %511 = vmatmul.mubr.f32.gmra.mrb[0].mxu0 %v510
        %v512 = vpop.f32.mrb[0].mxu0
        %v513 = vadd.f32 %v439, %v512
        %v514 = vpop.f32.mrb[0].mxu0
        %515 = vdwg.mxu0
        %516 = vmatprep.subr.mxu0 0.0
        %v517 = vand.u32 %v226, 4294901760
        %518 = vmatpush1.msra.mxu0 %v517
        %519 = vmatprep.subr.mxu0 0.0
        %520 = vmatpush1.msra.mxu0 0.0
        %521 = vmatprep.subr.mxu0 0.0
        %522 = vmatpush1.msra.mxu0 0.0
        %523 = vmatprep.subr.mxu0 0.0
        %524 = vmatpush1.msra.mxu0 0.0
        %525 = vmatprep.subr.mxu0 0.0
        %526 = vmatpush1.msra.mxu0 0.0
        %527 = vmatprep.subr.mxu0 0.0
        %528 = vmatpush1.msra.mxu0 0.0
        %529 = vmatprep.subr.mxu0 0.0
        %530 = vmatpush1.msra.mxu0 0.0
        %531 = vmatprep.subr.mxu0 0.0
        %532 = vmatpush1.msra.mxu0 0.0
        %533 = vmatprep.subr.mxu0 0.0
        %534 = vmatpush1.msra.mxu0 0.0
        %535 = vmatprep.subr.mxu0 0.0
        %536 = vmatpush1.msra.mxu0 0.0
        %537 = vmatprep.subr.mxu0 0.0
        %538 = vmatpush1.msra.mxu0 0.0
        %539 = vmatprep.subr.mxu0 0.0
        %540 = vmatpush1.msra.mxu0 0.0
        %541 = vmatprep.subr.mxu0 0.0
        %542 = vmatpush1.msra.mxu0 0.0
        %543 = vmatprep.subr.mxu0 0.0
        %544 = vmatpush1.msra.mxu0 0.0
        %545 = vmatprep.subr.mxu0 0.0
        %546 = vmatpush1.msra.mxu0 0.0
        %547 = vmatprep.subr.mxu0 0.0
        %548 = vmatpush1.msra.mxu0 0.0
        %549 = vmatprep.subr.mxu0 0.0
        %550 = vmatpush1.msra.mxu0 0.0
        %551 = vmatprep.subr.mxu0 0.0
        %552 = vmatpush1.msra.mxu0 0.0
        %553 = vmatprep.subr.mxu0 0.0
        %554 = vmatpush1.msra.mxu0 0.0
        %555 = vmatprep.subr.mxu0 0.0
        %556 = vmatpush1.msra.mxu0 0.0
        %557 = vmatprep.subr.mxu0 0.0
        %558 = vmatpush1.msra.mxu0 0.0
        %559 = vmatprep.subr.mxu0 0.0
        %560 = vmatpush1.msra.mxu0 0.0
        %561 = vmatprep.subr.mxu0 0.0
        %562 = vmatpush1.msra.mxu0 0.0
        %563 = vmatprep.subr.mxu0 0.0
        %564 = vmatpush1.msra.mxu0 0.0
        %565 = vmatprep.subr.mxu0 0.0
        %566 = vmatpush1.msra.mxu0 0.0
        %567 = vmatprep.subr.mxu0 0.0
        %568 = vmatpush1.msra.mxu0 0.0
        %569 = vmatprep.subr.mxu0 0.0
        %570 = vmatpush1.msra.mxu0 0.0
        %571 = vmatprep.subr.mxu0 0.0
        %572 = vmatpush1.msra.mxu0 0.0
        %573 = vmatprep.subr.mxu0 0.0
        %574 = vmatpush1.msra.mxu0 0.0
        %575 = vmatprep.subr.mxu0 0.0
        %576 = vmatpush1.msra.mxu0 0.0
        %577 = vmatprep.subr.mxu0 0.0
        %578 = vmatpush1.msra.mxu0 0.0
        %579 = vmatprep.subr.mxu0 0.0
        %580 = vmatpush1.msra.mxu0 0.0
        %581 = vmatprep.mubr.f32.mxu0 0.0
        %v582 = vand.u32 %v288, 4294901760
        %v583 = vsub.f32 %v288, %v582
        %v584 = vand.u32 %v583, 4294901760
        %585 = vmatmul.mubr.f32.gmra.mrb[0].mxu0 %v584
        %v586 = vpop.f32.mrb[0].mxu0
        %v587 = vadd.f32 %v513, %v586
        %v588 = vpop.f32.mrb[0].mxu0
        %589 = vdwg.mxu0
        %590 = vmatprep.subr.mxu0 0.0
        %v591 = vand.u32 %v226, 4294901760
        %v592 = vsub.f32 %v226, %v591
        %v593 = vand.u32 %v592, 4294901760
        %594 = vmatpush1.msra.mxu0 %v593
        %595 = vmatprep.subr.mxu0 0.0
        %596 = vmatpush1.msra.mxu0 0.0
        %597 = vmatprep.subr.mxu0 0.0
        %598 = vmatpush1.msra.mxu0 0.0
        %599 = vmatprep.subr.mxu0 0.0
        %600 = vmatpush1.msra.mxu0 0.0
        %601 = vmatprep.subr.mxu0 0.0
        %602 = vmatpush1.msra.mxu0 0.0
        %603 = vmatprep.subr.mxu0 0.0
        %604 = vmatpush1.msra.mxu0 0.0
        %605 = vmatprep.subr.mxu0 0.0
        %606 = vmatpush1.msra.mxu0 0.0
        %607 = vmatprep.subr.mxu0 0.0
        %608 = vmatpush1.msra.mxu0 0.0
        %609 = vmatprep.subr.mxu0 0.0
        %610 = vmatpush1.msra.mxu0 0.0
        %611 = vmatprep.subr.mxu0 0.0
        %612 = vmatpush1.msra.mxu0 0.0
        %613 = vmatprep.subr.mxu0 0.0
        %614 = vmatpush1.msra.mxu0 0.0
        %615 = vmatprep.subr.mxu0 0.0
        %616 = vmatpush1.msra.mxu0 0.0
        %617 = vmatprep.subr.mxu0 0.0
        %618 = vmatpush1.msra.mxu0 0.0
        %619 = vmatprep.subr.mxu0 0.0
        %620 = vmatpush1.msra.mxu0 0.0
        %621 = vmatprep.subr.mxu0 0.0
        %622 = vmatpush1.msra.mxu0 0.0
        %623 = vmatprep.subr.mxu0 0.0
        %624 = vmatpush1.msra.mxu0 0.0
        %625 = vmatprep.subr.mxu0 0.0
        %626 = vmatpush1.msra.mxu0 0.0
        %627 = vmatprep.subr.mxu0 0.0
        %628 = vmatpush1.msra.mxu0 0.0
        %629 = vmatprep.subr.mxu0 0.0
        %630 = vmatpush1.msra.mxu0 0.0
        %631 = vmatprep.subr.mxu0 0.0
        %632 = vmatpush1.msra.mxu0 0.0
        %633 = vmatprep.subr.mxu0 0.0
        %634 = vmatpush1.msra.mxu0 0.0
        %635 = vmatprep.subr.mxu0 0.0
        %636 = vmatpush1.msra.mxu0 0.0
        %637 = vmatprep.subr.mxu0 0.0
        %638 = vmatpush1.msra.mxu0 0.0
        %639 = vmatprep.subr.mxu0 0.0
        %640 = vmatpush1.msra.mxu0 0.0
        %641 = vmatprep.subr.mxu0 0.0
        %642 = vmatpush1.msra.mxu0 0.0
        %643 = vmatprep.subr.mxu0 0.0
        %644 = vmatpush1.msra.mxu0 0.0
        %645 = vmatprep.subr.mxu0 0.0
        %646 = vmatpush1.msra.mxu0 0.0
        %647 = vmatprep.subr.mxu0 0.0
        %648 = vmatpush1.msra.mxu0 0.0
        %649 = vmatprep.subr.mxu0 0.0
        %650 = vmatpush1.msra.mxu0 0.0
        %651 = vmatprep.subr.mxu0 0.0
        %652 = vmatpush1.msra.mxu0 0.0
        %653 = vmatprep.subr.mxu0 0.0
        %654 = vmatpush1.msra.mxu0 0.0
        %655 = vmatprep.subr.mxu0 0.0
        %656 = vmatpush1.msra.mxu0 0.0
        %657 = vmatprep.mubr.f32.mxu0 0.0
        %v658 = vand.u32 %v288, 4294901760
        %659 = vmatmul.mubr.f32.gmra.mrb[0].mxu0 %v658
        %v660 = vpop.f32.mrb[0].mxu0
        %v661 = vadd.f32 %v587, %v660
        %v662 = vpop.f32.mrb[0].mxu0
        %663 = vdwg.mxu0
        %664 = vmatprep.subr.mxu0 0.0
        %v665 = vand.u32 %v226, 4294901760
        %666 = vmatpush1.msra.mxu0 %v665
        %667 = vmatprep.subr.mxu0 0.0
        %668 = vmatpush1.msra.mxu0 0.0
        %669 = vmatprep.subr.mxu0 0.0
        %670 = vmatpush1.msra.mxu0 0.0
        %671 = vmatprep.subr.mxu0 0.0
        %672 = vmatpush1.msra.mxu0 0.0
        %673 = vmatprep.subr.mxu0 0.0
        %674 = vmatpush1.msra.mxu0 0.0
        %675 = vmatprep.subr.mxu0 0.0
        %676 = vmatpush1.msra.mxu0 0.0
        %677 = vmatprep.subr.mxu0 0.0
        %678 = vmatpush1.msra.mxu0 0.0
        %679 = vmatprep.subr.mxu0 0.0
        %680 = vmatpush1.msra.mxu0 0.0
        %681 = vmatprep.subr.mxu0 0.0
        %682 = vmatpush1.msra.mxu0 0.0
        %683 = vmatprep.subr.mxu0 0.0
        %684 = vmatpush1.msra.mxu0 0.0
        %685 = vmatprep.subr.mxu0 0.0
        %686 = vmatpush1.msra.mxu0 0.0
        %687 = vmatprep.subr.mxu0 0.0
        %688 = vmatpush1.msra.mxu0 0.0
        %689 = vmatprep.subr.mxu0 0.0
        %690 = vmatpush1.msra.mxu0 0.0
        %691 = vmatprep.subr.mxu0 0.0
        %692 = vmatpush1.msra.mxu0 0.0
        %693 = vmatprep.subr.mxu0 0.0
        %694 = vmatpush1.msra.mxu0 0.0
        %695 = vmatprep.subr.mxu0 0.0
        %696 = vmatpush1.msra.mxu0 0.0
        %697 = vmatprep.subr.mxu0 0.0
        %698 = vmatpush1.msra.mxu0 0.0
        %699 = vmatprep.subr.mxu0 0.0
        %700 = vmatpush1.msra.mxu0 0.0
        %701 = vmatprep.subr.mxu0 0.0
        %702 = vmatpush1.msra.mxu0 0.0
        %703 = vmatprep.subr.mxu0 0.0
        %704 = vmatpush1.msra.mxu0 0.0
        %705 = vmatprep.subr.mxu0 0.0
        %706 = vmatpush1.msra.mxu0 0.0
        %707 = vmatprep.subr.mxu0 0.0
        %708 = vmatpush1.msra.mxu0 0.0
        %709 = vmatprep.subr.mxu0 0.0
        %710 = vmatpush1.msra.mxu0 0.0
        %711 = vmatprep.subr.mxu0 0.0
        %712 = vmatpush1.msra.mxu0 0.0
        %713 = vmatprep.subr.mxu0 0.0
        %714 = vmatpush1.msra.mxu0 0.0
        %715 = vmatprep.subr.mxu0 0.0
        %716 = vmatpush1.msra.mxu0 0.0
        %717 = vmatprep.subr.mxu0 0.0
        %718 = vmatpush1.msra.mxu0 0.0
        %719 = vmatprep.subr.mxu0 0.0
        %720 = vmatpush1.msra.mxu0 0.0
        %721 = vmatprep.subr.mxu0 0.0
        %722 = vmatpush1.msra.mxu0 0.0
        %723 = vmatprep.subr.mxu0 0.0
        %724 = vmatpush1.msra.mxu0 0.0
        %725 = vmatprep.subr.mxu0 0.0
        %726 = vmatpush1.msra.mxu0 0.0
        %727 = vmatprep.subr.mxu0 0.0
        %728 = vmatpush1.msra.mxu0 0.0
        %729 = vmatprep.mubr.f32.mxu0 0.0
        %v730 = vand.u32 %v288, 4294901760
        %731 = vmatmul.mubr.f32.gmra.mrb[0].mxu0 %v730
        %v732 = vpop.f32.mrb[0].mxu0
        %v733 = vadd.f32 %v661, %v732
        %v734 = vpop.f32.mrb[0].mxu0
        %735 = vdwg.mxu0
        %v736 = vadd.f32 %v253, %v733
        %vm737 = vcmask 254976
        %738 = vst.msk [vmem:[#allocation2] sm:$0x3] %vm737, %v736
        %v739 = vld [vmem:[#allocation3] sm:$0x1]
        %vm740 = vcmask 7168
        %v741 = vsel %vm740, %v243, 0.0
        %v742 = vrot.slane %v741, 4
        %v743 = vadd.f32 %v741, %v742
        %v744 = vrot.slane %v743, 2
        %v745 = vadd.f32 %v743, %v744
        %v746 = vrot.slane %v745, 1
        %v747 = vadd.f32 %v745, %v746
        %v748 = vadd.f32 %v739, %v747
        %vm749 = vcmask 0
        %750 = vst.msk [vmem:[#allocation3] sm:$0x1] %vm749, %v748
        %p751 = scmp.eq.s32.totalorder %s25, 1
        // Predicated region
        $region41: #{tpu_custom_call.1} parent=31 // pred_check
          %p752 = pneg %p751
        $region42: #{tpu_custom_call.1} parent=31 // pred_check_branch
          %754 = sbr.rel (%p752) target = $region44
        $region43: #{tpu_custom_call.1} parent=31 // pred_region
          %v755 = vld [vmem:[#allocation3] sm:$0x1]
          %v756 = vrcp.pop %v755
          %v757 = vmul.f32 %v755, %v756
          %v758 = vsub.f32 2.0, %v757
          %v759 = vmul.f32 %v756, %v758
          %v760 = vld [vmem:[#allocation2] sm:$0x3]
          %762 = vset.pattern.permute.xlu0 0
          %763 = vperm.xlu0 %762, %v759
          %v764 = vpop.permute.xlu0 %763
          %v766 = vlaneseq
          %v767 = vshrl.u32 %v766, 7
          %v768 = vsub.s32 0, %v767
          %v769 = vrot.slane %v764, %v768
          %v770 = vmul.f32 %v760, %v769
          %v771 = vmul.f32 %v760, 1e-10
          %v773 = vrot.slane %v771, 1
          %v775 = vadd.f32 %v770, %v773
          %vm776 = vcmask 253952
          %777 = vst.msk [vmem:[%s213] sm:$0x1] %vm776, %v775
        $region44: #{tpu_custom_call.1} parent=31 // pred_fallthru
          _
        %s778 = sand.u32 %s115, 1
        %s779 = scalar_lea.sflag [#allocation6], %s778
        %s780 = sand.u32 %s115, 1
        %s781 = scalar_lea.vmem [#allocation7], %s780
        // Predicated region
        $region45: #{tpu_custom_call.1} parent=31 // pred_check
          %p782 = pneg %p125
        $region46: #{tpu_custom_call.1} parent=31 // pred_check_branch
          %784 = sbr.rel (%p782) target = $region48
        $region47: #{tpu_custom_call.1} parent=31 // pred_region
          %s786 = ssub.s32 16, 16
          %787 = vsyncadd %s779, %s786
          %s788 = smul.addr %s24, 16
          %s789 = scalar_lea.hbm %s3, %s788
          %s791 = sshll.u32 %s781, 4
          %s792 = int_to_ptr.vmem [resolvable:$true] %s791
          %794 = dma.vmem_to_hbm [thread:$0]  %s792, 16, %s789, %s779
        $region48: #{tpu_custom_call.1} parent=31 // pred_fallthru
          _
      $region32: #{tpu_custom_call.1} parent=5 // pred_fallthru
        _
      %p795 = scmp.le.s32.totalorder 2, %s15
      // Predicated region
      $region49: #{tpu_custom_call.1} parent=5 // pred_check
        %p796 = pneg %p795
      $region50: #{tpu_custom_call.1} parent=5 // pred_check_branch
        %798 = sbr.rel (%p796) target = $region52
      $region51: #{tpu_custom_call.1} parent=5 // pred_region
        %s799 = ssub.s32 %s15, 2
        // Predicated region
        $region53: #{tpu_custom_call.1} parent=51 // pred_check
          %p800 = pneg %p131
        $region54: #{tpu_custom_call.1} parent=51 // pred_check_branch
          %802 = sbr.rel (%p800) target = $region56
        $region55: #{tpu_custom_call.1} parent=51 // pred_region
          %s803 = sand.u32 %s116, 1
          %s804 = scalar_lea.sflag [#allocation6], %s803
          %s805 = sand.u32 %s116, 1
          %s806 = scalar_lea.vmem [#allocation7], %s805
          %807 = dma.done %s804, 16
        $region56: #{tpu_custom_call.1} parent=51 // pred_fallthru
          _
      $region52: #{tpu_custom_call.1} parent=5 // pred_fallthru
        _
    $region6: #{tpu_custom_call.1} parent=1 // loop_footer
      %s19 = sadd.s32 1, %s15
    $region7: #{tpu_custom_call.1} parent=1 // loop_footer_branch
      %14 = sbr.rel target = $region3
    $region8: #{tpu_custom_call.1} parent=1 // loop_exit
      _
    %808 = vsyncpa [#allocation5], 1
    %s809 = scalar_lea.sflag [#allocation5], 1
    %810 = vsyncpa %s809, 1
    %811 = vsyncpa [#allocation6], 1
    %s812 = scalar_lea.sflag [#allocation6], 1
    %813 = vsyncpa %s812, 1

</llo_original>
